<compile_context>
chip_gen: v7x
topology: tpu7x:2x2x1
jax: 0.10.0
libtpu: 0.0.40
codegen_flags: <defaults>
</compile_context>

<pallas_src>
import functools

import jax
import jax.numpy as jnp
from jax.experimental import pallas as pl
from jax.experimental.pallas import tpu as pltpu

HIDDEN = 512


def _round_up(a, m):
    return (a + m - 1) // m * m


def cvae_kernel(x_ref, cls_ref, eps_ref,
                w_in_ref, w_head_ref, b_head_ref, w4_ref, b4_ref,
                mulv_ref, recon_ref,
                *, id_pad, latent, hidden):
    """Fused CVAE forward for one batch tile.

    x_ref     : (TB, id_pad)              zero-padded inputs
    cls_ref   : (TB, 2*hidden)            [yoh@W1y + b1 | yoh@W3y + b3] (precomputed)
    eps_ref   : (TB, latent)
    w_in_ref  : (id_pad + lat_pad, hidden) rows [0:id_pad]=W1x (padded), [id_pad:+latent]=W3z
    w_head_ref: (hidden, 2*latent)         [W21 | W22] fused head
    b_head_ref: (1, 2*latent)              [b21 | b22]
    w4_ref    : (hidden, id_pad)           W4 zero-padded on the feature dim
    b4_ref    : (1, id_pad)
    mulv_ref  : (TB, 2*latent)   out: [mu | logvar]
    recon_ref : (TB, id_pad)     out: sigmoid(fc4(h3)) (feature-padded)
    """
    x = x_ref[...]
    cls1 = cls_ref[:, :hidden]          # class contribution + b1 (encoder)
    cls3 = cls_ref[:, hidden:]          # class contribution + b3 (decoder)

    # ---- encode: h1 = relu(fc1([x, y_onehot])) ----
    h1 = jnp.dot(x, w_in_ref[0:id_pad, :], preferred_element_type=jnp.float32)
    h1 = jnp.maximum(h1 + cls1, 0.0)

    # fused mu/logvar head: a single (hidden, 2*latent) matmul
    mulv = jnp.dot(h1, w_head_ref[...], preferred_element_type=jnp.float32)
    mulv = mulv + b_head_ref[...]
    mu = mulv[:, :latent]
    logvar = mulv[:, latent:]

    # ---- reparameterize: z = mu + eps * exp(0.5 * logvar) ----
    z = mu + eps_ref[...] * jnp.exp(0.5 * logvar)

    # ---- decode: h3 = relu(fc3([z, y_onehot])), recon = sigmoid(fc4(h3)) ----
    h3 = jnp.dot(z, w_in_ref[id_pad:id_pad + latent, :],
                 preferred_element_type=jnp.float32)
    h3 = jnp.maximum(h3 + cls3, 0.0)

    logits = jnp.dot(h3, w4_ref[...], preferred_element_type=jnp.float32)
    logits = logits + b4_ref[...]
    # numerically-stable sigmoid via EUP tanh: sigmoid(x) = 0.5*(tanh(x/2)+1)
    recon = 0.5 * (jnp.tanh(0.5 * logits) + 1.0)

    mulv_ref[...] = mulv
    recon_ref[...] = recon


def init_linear(key, fan_in, fan_out):
    """nn.Linear-style init: U(-1/sqrt(fan_in), 1/sqrt(fan_in)).
    Returns W (fan_in, fan_out) and b (1, fan_out) (transposed vs PyTorch)."""
    kw, kb = jax.random.split(key)
    bound = 1.0 / jnp.sqrt(fan_in)
    w = jax.random.uniform(kw, (fan_in, fan_out), jnp.float32, -bound, bound)
    b = jax.random.uniform(kb, (1, fan_out), jnp.float32, -bound, bound)
    return w, b


def make_cvae_params(key, input_dim, latent_dim, num_classes, hidden=HIDDEN):
    keys = jax.random.split(key, 5)
    w1, b1 = init_linear(keys[0], input_dim + num_classes, hidden)
    w21, b21 = init_linear(keys[1], hidden, latent_dim)
    w22, b22 = init_linear(keys[2], hidden, latent_dim)
    w3, b3 = init_linear(keys[3], latent_dim + num_classes, hidden)
    w4, b4 = init_linear(keys[4], hidden, input_dim)
    # Split the concat-weights into x / one-hot (and z / one-hot) parts.
    return dict(
        w1x=w1[:input_dim], w1y=w1[input_dim:], b1=b1,
        w21=w21, b21=b21, w22=w22, b22=b22,
        w3z=w3[:latent_dim], w3y=w3[latent_dim:], b3=b3,
        w4=w4, b4=b4,
    )


def pack_cvae_params(params, input_dim, latent_dim, hidden=HIDDEN):
    """Reorganize weights into kernel-friendly packed arrays."""
    id_pad = _round_up(input_dim, 8)
    lat_pad = _round_up(latent_dim, 8)

    # Encoder/decoder input-side weights in one slab with 8-aligned row segments.
    w_in = jnp.zeros((id_pad + lat_pad, hidden), jnp.float32)
    w_in = w_in.at[:input_dim, :].set(params["w1x"])
    w_in = w_in.at[id_pad:id_pad + latent_dim, :].set(params["w3z"])

    # Fused mu/logvar head.
    w_head = jnp.concatenate([params["w21"], params["w22"]], axis=1)
    b_head = jnp.concatenate([params["b21"], params["b22"]], axis=1)

    # Decoder output weights, zero-padded on the feature dim.
    w4 = jnp.zeros((hidden, id_pad), jnp.float32).at[:, :input_dim].set(params["w4"])
    b4 = jnp.zeros((1, id_pad), jnp.float32).at[:, :input_dim].set(params["b4"])

    # Per-class contribution table: row c = [ W1y[c] + b1 | W3y[c] + b3 ].
    cls_tables = jnp.concatenate(
        [params["w1y"] + params["b1"], params["w3y"] + params["b3"]], axis=1)

    return dict(w_in=w_in, w_head=w_head, b_head=b_head, w4=w4, b4=b4,
                cls_tables=cls_tables, id_pad=id_pad)


def cvae_forward(x, y, eps, packed, input_dim, latent_dim, num_classes,
                 hidden=HIDDEN, max_block_b=512):
    """x: (B, input_dim) f32; y: (B,) int32 labels; eps: (B, latent_dim) f32.
    Returns (recon, mu, logvar), matching CVAE.forward (eps supplied explicitly)."""
    x = x.reshape(-1, input_dim).astype(jnp.float32)   # x.view(-1, input_dim)
    B = x.shape[0]
    id_pad = packed["id_pad"]

    # Pad the batch to a multiple of 8 (f32 sublane tile); tile big batches.
    tb = min(_round_up(B, 8), max_block_b)
    b_pad = _round_up(B, tb)

    x_p = jnp.zeros((b_pad, id_pad), jnp.float32).at[:B, :input_dim].set(x)
    eps_p = jnp.zeros((b_pad, latent_dim), jnp.float32).at[:B].set(
        eps.astype(jnp.float32))
    # one-hot @ W  ==  gather of per-class rows (biases b1/b3 folded in).
    cls = jnp.zeros((b_pad, 2 * hidden), jnp.float32).at[:B].set(
        jnp.take(packed["cls_tables"], y, axis=0))

    batch_map = lambda i: (i, 0)
    const_map = lambda i: (0, 0)

    kernel = functools.partial(cvae_kernel, id_pad=id_pad,
                               latent=latent_dim, hidden=hidden)

    mulv, recon_p = pl.pallas_call(
        kernel,
        out_shape=(
            jax.ShapeDtypeStruct((b_pad, 2 * latent_dim), jnp.float32),
            jax.ShapeDtypeStruct((b_pad, id_pad), jnp.float32),
        ),
        grid_spec=pltpu.PrefetchScalarGridSpec(
            num_scalar_prefetch=0,
            grid=(b_pad // tb,),
            in_specs=[
                pl.BlockSpec((tb, id_pad), batch_map),              # x
                pl.BlockSpec((tb, 2 * hidden), batch_map),          # [cls1|cls3]
                pl.BlockSpec((tb, latent_dim), batch_map),          # eps
                pl.BlockSpec(packed["w_in"].shape, const_map),      # W1x/W3z slab
                pl.BlockSpec((hidden, 2 * latent_dim), const_map),  # [W21|W22]
                pl.BlockSpec((1, 2 * latent_dim), const_map),       # [b21|b22]
                pl.BlockSpec((hidden, id_pad), const_map),          # W4
                pl.BlockSpec((1, id_pad), const_map),               # b4
            ],
            out_specs=(
                pl.BlockSpec((tb, 2 * latent_dim), batch_map),      # [mu|logvar]
                pl.BlockSpec((tb, id_pad), batch_map),              # recon (padded)
            ),
        ),
        compiler_params=pltpu.CompilerParams(
            dimension_semantics=("parallel",),
        ),
    )(x_p, cls, eps_p, packed["w_in"], packed["w_head"], packed["b_head"],
      packed["w4"], packed["b4"])

    recon = recon_p[:B, :input_dim]
    mu = mulv[:B, :latent_dim]
    logvar = mulv[:B, latent_dim:]
    return recon, mu, logvar


if __name__ == "__main__":
    # 21 symptom features, 3 target classes, latent_dim=8, batch=4, hidden=512
    # (hidden is fixed by the module).
    input_dim, latent_dim, num_classes = 21, 8, 3
    batch = 4

    root = jax.random.PRNGKey(0)
    k_params, k_x, k_y, k_eps = jax.random.split(root, 4)

    params = make_cvae_params(k_params, input_dim, latent_dim, num_classes)
    packed = pack_cvae_params(params, input_dim, latent_dim)

    x = (jax.random.uniform(k_x, (batch, input_dim), jnp.float32) > 0.5).astype(jnp.float32)
    y = jax.random.randint(k_y, (batch,), 0, num_classes, dtype=jnp.int32)
    eps = jax.random.normal(k_eps, (batch, latent_dim), jnp.float32)  # torch.randn_like(std)

    recon, mu, logvar = cvae_forward(x, y, eps, packed,
                                     input_dim, latent_dim, num_classes)
    jax.block_until_ready((recon, mu, logvar))

    # Pure-JAX reference (same math as the PyTorch module, eps supplied explicitly).
    yoh = jax.nn.one_hot(y, num_classes, dtype=jnp.float32)
    h1 = jnp.maximum(x @ params["w1x"] + yoh @ params["w1y"] + params["b1"], 0.0)
    mu_r = h1 @ params["w21"] + params["b21"]
    lv_r = h1 @ params["w22"] + params["b22"]
    z_r = mu_r + eps * jnp.exp(0.5 * lv_r)
    h3 = jnp.maximum(z_r @ params["w3z"] + yoh @ params["w3y"] + params["b3"], 0.0)
    rec_r = jax.nn.sigmoid(h3 @ params["w4"] + params["b4"])

    assert jnp.allclose(mu, mu_r, atol=1e-4), float(jnp.max(jnp.abs(mu - mu_r)))
    assert jnp.allclose(logvar, lv_r, atol=1e-4), float(jnp.max(jnp.abs(logvar - lv_r)))
    assert jnp.allclose(recon, rec_r, atol=1e-4), float(jnp.max(jnp.abs(recon - rec_r)))

    print("KERNEL_OK")
</pallas_src>

<mosaic_0001>
module attributes {stable_mosaic.version = 11 : i64} {
  func.func @cvae_kernel(%arg0: i32, %arg1: memref<8x24xf32, #tpu.memory_space<vmem>>, %arg2: memref<8x1024xf32, #tpu.memory_space<vmem>>, %arg3: memref<8x8xf32, #tpu.memory_space<vmem>>, %arg4: memref<32x512xf32, #tpu.memory_space<vmem>>, %arg5: memref<512x16xf32, #tpu.memory_space<vmem>>, %arg6: memref<1x16xf32, #tpu.memory_space<vmem>>, %arg7: memref<512x24xf32, #tpu.memory_space<vmem>>, %arg8: memref<1x24xf32, #tpu.memory_space<vmem>>, %arg9: memref<8x16xf32, #tpu.memory_space<vmem>>, %arg10: memref<8x24xf32, #tpu.memory_space<vmem>>) attributes {dimension_semantics = [#tpu.dimension_semantics<parallel>], iteration_bounds = array<i64: 1>, scalar_prefetch = 0 : i64, scratch_operands = 0 : i64, tpu.core_type = #tpu.core_type<tc>, window_params = [{transform_indices = @transform_0, window_bounds = array<i64: 8, 24>}, {transform_indices = @transform_1, window_bounds = array<i64: 8, 1024>}, {transform_indices = @transform_2, window_bounds = array<i64: 8, 8>}, {pipeline_mode = #tpu.pipeline_mode<synchronous>, transform_indices = @transform_3, window_bounds = array<i64: 32, 512>}, {pipeline_mode = #tpu.pipeline_mode<synchronous>, transform_indices = @transform_4, window_bounds = array<i64: 512, 16>}, {pipeline_mode = #tpu.pipeline_mode<synchronous>, transform_indices = @transform_5, window_bounds = array<i64: 1, 16>}, {pipeline_mode = #tpu.pipeline_mode<synchronous>, transform_indices = @transform_6, window_bounds = array<i64: 512, 24>}, {pipeline_mode = #tpu.pipeline_mode<synchronous>, transform_indices = @transform_7, window_bounds = array<i64: 1, 24>}, {transform_indices = @transform_8, window_bounds = array<i64: 8, 16>}, {transform_indices = @transform_9, window_bounds = array<i64: 8, 24>}]} {
    %c0 = arith.constant 0 : index
    %c0_0 = arith.constant 0 : index
    %0 = vector.load %arg1[%c0, %c0_0] : memref<8x24xf32, #tpu.memory_space<vmem>>, vector<8x24xf32>
    %c0_1 = arith.constant 0 : index
    %c0_2 = arith.constant 0 : index
    %1 = vector.load %arg2[%c0_1, %c0_2] : memref<8x1024xf32, #tpu.memory_space<vmem>>, vector<8x512xf32>
    %c0_3 = arith.constant 0 : index
    %c512 = arith.constant 512 : index
    %2 = vector.load %arg2[%c0_3, %c512] : memref<8x1024xf32, #tpu.memory_space<vmem>>, vector<8x512xf32>
    %c0_4 = arith.constant 0 : index
    %c0_5 = arith.constant 0 : index
    %3 = vector.load %arg4[%c0_4, %c0_5] : memref<32x512xf32, #tpu.memory_space<vmem>>, vector<24x512xf32>
    %cst = arith.constant dense<0.000000e+00> : vector<8x512xf32>
    %4 = tpu.matmul %0, %3, %cst {dimension_numbers = #tpu.dot_dimension_numbers<[1], [0], [0], [1], [0, 0, 1, 1], [], []>} : vector<8x24xf32>, vector<24x512xf32>, vector<8x512xf32> -> vector<8x512xf32>
    %5 = arith.addf %4, %1 : vector<8x512xf32>
    %cst_6 = arith.constant 0.000000e+00 : f32
    %6 = vector.broadcast %cst_6 : f32 to vector<8x512xf32>
    %7 = arith.maximumf %5, %6 : vector<8x512xf32>
    %c0_7 = arith.constant 0 : index
    %c0_8 = arith.constant 0 : index
    %8 = vector.load %arg5[%c0_7, %c0_8] : memref<512x16xf32, #tpu.memory_space<vmem>>, vector<512x16xf32>
    %cst_9 = arith.constant dense<0.000000e+00> : vector<8x16xf32>
    %9 = tpu.matmul %7, %8, %cst_9 {dimension_numbers = #tpu.dot_dimension_numbers<[1], [0], [0], [1], [0, 0, 1, 1], [], []>} : vector<8x512xf32>, vector<512x16xf32>, vector<8x16xf32> -> vector<8x16xf32>
    %c0_10 = arith.constant 0 : index
    %c0_11 = arith.constant 0 : index
    %10 = vector.load %arg6[%c0_10, %c0_11] : memref<1x16xf32, #tpu.memory_space<vmem>>, vector<1x16xf32>
    %11 = vector.broadcast %10 : vector<1x16xf32> to vector<8x16xf32>
    %12 = arith.addf %9, %11 : vector<8x16xf32>
    %13 = vector.extract_strided_slice %12 {offsets = [0, 0], sizes = [8, 8], strides = [1, 1]} : vector<8x16xf32> to vector<8x8xf32>
    %14 = vector.extract_strided_slice %12 {offsets = [0, 8], sizes = [8, 8], strides = [1, 1]} : vector<8x16xf32> to vector<8x8xf32>
    %c0_12 = arith.constant 0 : index
    %c0_13 = arith.constant 0 : index
    %15 = vector.load %arg3[%c0_12, %c0_13] : memref<8x8xf32, #tpu.memory_space<vmem>>, vector<8x8xf32>
    %cst_14 = arith.constant 5.000000e-01 : f32
    %16 = vector.broadcast %cst_14 : f32 to vector<8x8xf32>
    %17 = arith.mulf %16, %14 : vector<8x8xf32>
    %18 = math.exp %17 : vector<8x8xf32>
    %19 = arith.mulf %15, %18 : vector<8x8xf32>
    %20 = arith.addf %13, %19 : vector<8x8xf32>
    %c24 = arith.constant 24 : index
    %c0_15 = arith.constant 0 : index
    %21 = vector.load %arg4[%c24, %c0_15] : memref<32x512xf32, #tpu.memory_space<vmem>>, vector<8x512xf32>
    %cst_16 = arith.constant dense<0.000000e+00> : vector<8x512xf32>
    %22 = tpu.matmul %20, %21, %cst_16 {dimension_numbers = #tpu.dot_dimension_numbers<[1], [0], [0], [1], [0, 0, 1, 1], [], []>} : vector<8x8xf32>, vector<8x512xf32>, vector<8x512xf32> -> vector<8x512xf32>
    %23 = arith.addf %22, %2 : vector<8x512xf32>
    %cst_17 = arith.constant 0.000000e+00 : f32
    %24 = vector.broadcast %cst_17 : f32 to vector<8x512xf32>
    %25 = arith.maximumf %23, %24 : vector<8x512xf32>
    %c0_18 = arith.constant 0 : index
    %c0_19 = arith.constant 0 : index
    %26 = vector.load %arg7[%c0_18, %c0_19] : memref<512x24xf32, #tpu.memory_space<vmem>>, vector<512x24xf32>
    %cst_20 = arith.constant dense<0.000000e+00> : vector<8x24xf32>
    %27 = tpu.matmul %25, %26, %cst_20 {dimension_numbers = #tpu.dot_dimension_numbers<[1], [0], [0], [1], [0, 0, 1, 1], [], []>} : vector<8x512xf32>, vector<512x24xf32>, vector<8x24xf32> -> vector<8x24xf32>
    %c0_21 = arith.constant 0 : index
    %c0_22 = arith.constant 0 : index
    %28 = vector.load %arg8[%c0_21, %c0_22] : memref<1x24xf32, #tpu.memory_space<vmem>>, vector<1x24xf32>
    %29 = vector.broadcast %28 : vector<1x24xf32> to vector<8x24xf32>
    %30 = arith.addf %27, %29 : vector<8x24xf32>
    %cst_23 = arith.constant 5.000000e-01 : f32
    %31 = vector.broadcast %cst_23 : f32 to vector<8x24xf32>
    %32 = arith.mulf %31, %30 : vector<8x24xf32>
    %33 = math.tanh %32 : vector<8x24xf32>
    %cst_24 = arith.constant 1.000000e+00 : f32
    %34 = vector.broadcast %cst_24 : f32 to vector<8x24xf32>
    %35 = arith.addf %33, %34 : vector<8x24xf32>
    %cst_25 = arith.constant 5.000000e-01 : f32
    %36 = vector.broadcast %cst_25 : f32 to vector<8x24xf32>
    %37 = arith.mulf %36, %35 : vector<8x24xf32>
    %c0_26 = arith.constant 0 : index
    %c0_27 = arith.constant 0 : index
    %38 = vector.load %arg9[%c0_26, %c0_27] : memref<8x16xf32, #tpu.memory_space<vmem>>, vector<8x16xf32>
    tpu.vector_store %arg9[%c0_26, %c0_27], %12 {strides = array<i32>} : memref<8x16xf32, #tpu.memory_space<vmem>>, vector<8x16xf32>,
    %c0_28 = arith.constant 0 : index
    %c0_29 = arith.constant 0 : index
    %39 = vector.load %arg10[%c0_28, %c0_29] : memref<8x24xf32, #tpu.memory_space<vmem>>, vector<8x24xf32>
    tpu.vector_store %arg10[%c0_28, %c0_29], %37 {strides = array<i32>} : memref<8x24xf32, #tpu.memory_space<vmem>>, vector<8x24xf32>,
    return
  }
  func.func @transform_0(%arg0: i32) -> (i32, i32) {
    %c0_i32 = arith.constant 0 : i32
    %c0_i32_0 = arith.constant 0 : i32
    return %arg0, %c0_i32 : i32, i32
  }
  func.func @transform_1(%arg0: i32) -> (i32, i32) {
    %c0_i32 = arith.constant 0 : i32
    %c0_i32_0 = arith.constant 0 : i32
    return %arg0, %c0_i32 : i32, i32
  }
  func.func @transform_2(%arg0: i32) -> (i32, i32) {
    %c0_i32 = arith.constant 0 : i32
    %c0_i32_0 = arith.constant 0 : i32
    return %arg0, %c0_i32 : i32, i32
  }
  func.func @transform_3(%arg0: i32) -> (i32, i32) {
    %c0_i32 = arith.constant 0 : i32
    %c0_i32_0 = arith.constant 0 : i32
    %c0_i32_1 = arith.constant 0 : i32
    return %c0_i32, %c0_i32_0 : i32, i32
  }
  func.func @transform_4(%arg0: i32) -> (i32, i32) {
    %c0_i32 = arith.constant 0 : i32
    %c0_i32_0 = arith.constant 0 : i32
    %c0_i32_1 = arith.constant 0 : i32
    return %c0_i32, %c0_i32_0 : i32, i32
  }
  func.func @transform_5(%arg0: i32) -> (i32, i32) {
    %c0_i32 = arith.constant 0 : i32
    %c0_i32_0 = arith.constant 0 : i32
    %c0_i32_1 = arith.constant 0 : i32
    return %c0_i32, %c0_i32_0 : i32, i32
  }
  func.func @transform_6(%arg0: i32) -> (i32, i32) {
    %c0_i32 = arith.constant 0 : i32
    %c0_i32_0 = arith.constant 0 : i32
    %c0_i32_1 = arith.constant 0 : i32
    return %c0_i32, %c0_i32_0 : i32, i32
  }
  func.func @transform_7(%arg0: i32) -> (i32, i32) {
    %c0_i32 = arith.constant 0 : i32
    %c0_i32_0 = arith.constant 0 : i32
    %c0_i32_1 = arith.constant 0 : i32
    return %c0_i32, %c0_i32_0 : i32, i32
  }
  func.func @transform_8(%arg0: i32) -> (i32, i32) {
    %c0_i32 = arith.constant 0 : i32
    %c0_i32_0 = arith.constant 0 : i32
    return %arg0, %c0_i32 : i32, i32
  }
  func.func @transform_9(%arg0: i32) -> (i32, i32) {
    %c0_i32 = arith.constant 0 : i32
    %c0_i32_0 = arith.constant 0 : i32
    return %arg0, %c0_i32 : i32, i32
  }
}

</mosaic_0001>

<llo_original>
// kernel: tpu_custom_call.1
$region0: #{tpu_custom_call.1}
  #allocation0 [shape = 'u32[]', space=smem, size = 0x4, offset = 0x4, fixed_abs, tag = 'smem constant byte address 0x4 - core index']
  #allocation1 [shape = 'u32[144,128]{1,0:T(1,128)}', space=vmem, size = 0x12000, scoped, tag = 'internal scratch']
  %s0 = inlined_call_operand.vmem [shape: f32[8,24], index: 0, kind: input, shape index: {}]
  %s1 = inlined_call_operand.vmem [shape: f32[8,1024], index: 1, kind: input, shape index: {}]
  %s2 = inlined_call_operand.vmem [shape: f32[8,8], index: 2, kind: input, shape index: {}]
  %s3 = inlined_call_operand.vmem [shape: f32[32,512], index: 3, kind: input, shape index: {}]
  %s4 = inlined_call_operand.vmem [shape: f32[512,16], index: 4, kind: input, shape index: {}]
  %s5 = inlined_call_operand.vmem [shape: f32[1,16], index: 5, kind: input, shape index: {}]
  %s6 = inlined_call_operand.vmem [shape: f32[512,24], index: 6, kind: input, shape index: {}]
  %s7 = inlined_call_operand.vmem [shape: f32[1,24], index: 7, kind: input, shape index: {}]
  %s8 = inlined_call_operand.hbm [shape: f32[8,16], index: 8, kind: output, shape index: {0}]
  %s9 = inlined_call_operand.hbm [shape: f32[8,24], index: 9, kind: output, shape index: {1}]
  %10 = xla_tuple %s8, %s9
  %s11 = sld [smem:[#allocation0]]
  $region50: #{tpu_custom_call.1} parent=0
    _
  %s13 = ssub.s32 1, %s11
  %s14 = scalar_select 0, %s13, %s11
  $region1: #{tpu_custom_call.1} parent=0
    #allocation2 [shape = 'u8[4096]{0}', space=vmem, size = 0x1000, scoped, tag = 'output window, operand 0, single buffered']
    #allocation3 [shape = 's32[1]{0}', space=sflag, size = 0x4, scoped, tag = 'scoped memory for tpu_custom_call.1']
    #allocation4 [shape = 'u8[4096]{0}', space=vmem, size = 0x1000, scoped, tag = 'output window, operand 1, single buffered']
    #allocation5 [shape = 's32[1]{0}', space=sflag, size = 0x4, scoped, tag = 'scoped memory for tpu_custom_call.1']
    %15 = vsyncpa [#allocation3], 0
    %16 = vsyncpa [#allocation5], 0
    // Predicated region
    $region2: #{tpu_custom_call.1} parent=1 // pred_check
      _
    $region3: #{tpu_custom_call.1} parent=1 // pred_check_branch
      %18 = sbr.rel (0) target = $region5
    $region4: #{tpu_custom_call.1} parent=1 // pred_region
      _
    $region5: #{tpu_custom_call.1} parent=1 // pred_fallthru
      _
    // Predicated region
    $region6: #{tpu_custom_call.1} parent=1 // pred_check
      _
    $region7: #{tpu_custom_call.1} parent=1 // pred_check_branch
      %20 = sbr.rel (0) target = $region9
    $region8: #{tpu_custom_call.1} parent=1 // pred_region
      _
    $region9: #{tpu_custom_call.1} parent=1 // pred_fallthru
      _
    // Predicated region
    $region10: #{tpu_custom_call.1} parent=1 // pred_check
      _
    $region11: #{tpu_custom_call.1} parent=1 // pred_check_branch
      %22 = sbr.rel (0) target = $region13
    $region12: #{tpu_custom_call.1} parent=1 // pred_region
      _
    $region13: #{tpu_custom_call.1} parent=1 // pred_fallthru
      _
    // Predicated region
    $region14: #{tpu_custom_call.1} parent=1 // pred_check
      _
    $region15: #{tpu_custom_call.1} parent=1 // pred_check_branch
      %24 = sbr.rel (0) target = $region17
    $region16: #{tpu_custom_call.1} parent=1 // pred_region
      _
    $region17: #{tpu_custom_call.1} parent=1 // pred_fallthru
      _
    // Predicated region
    $region18: #{tpu_custom_call.1} parent=1 // pred_check
      _
    $region19: #{tpu_custom_call.1} parent=1 // pred_check_branch
      %26 = sbr.rel (0) target = $region21
    $region20: #{tpu_custom_call.1} parent=1 // pred_region
      _
    $region21: #{tpu_custom_call.1} parent=1 // pred_fallthru
      _
    // Predicated region
    $region22: #{tpu_custom_call.1} parent=1 // pred_check
      _
    $region23: #{tpu_custom_call.1} parent=1 // pred_check_branch
      %28 = sbr.rel (0) target = $region25
    $region24: #{tpu_custom_call.1} parent=1 // pred_region
      _
    $region25: #{tpu_custom_call.1} parent=1 // pred_fallthru
      _
    // Predicated region
    $region26: #{tpu_custom_call.1} parent=1 // pred_check
      _
    $region27: #{tpu_custom_call.1} parent=1 // pred_check_branch
      %30 = sbr.rel (0) target = $region29
    $region28: #{tpu_custom_call.1} parent=1 // pred_region
      _
    $region29: #{tpu_custom_call.1} parent=1 // pred_fallthru
      _
    // Predicated region
    $region30: #{tpu_custom_call.1} parent=1 // pred_check
      _
    $region31: #{tpu_custom_call.1} parent=1 // pred_check_branch
      %32 = sbr.rel (0) target = $region33
    $region32: #{tpu_custom_call.1} parent=1 // pred_region
      _
    $region33: #{tpu_custom_call.1} parent=1 // pred_fallthru
      _
    %v33 = vld [vmem:[%s0] sm:$0xff]
    %v34 = vld [vmem:[%s1] sm:$0xff]
    %v35 = vld [vmem:[%s1 + $0x8] sm:$0xff]
    %v36 = vld [vmem:[%s1 + $0x10] sm:$0xff]
    %v37 = vld [vmem:[%s1 + $0x18] sm:$0xff]
    %v38 = vld [vmem:[%s1 + $0x20] sm:$0xff]
    %v39 = vld [vmem:[%s1 + $0x28] sm:$0xff]
    %v40 = vld [vmem:[%s1 + $0x30] sm:$0xff]
    %v41 = vld [vmem:[%s1 + $0x38] sm:$0xff]
    %v42 = vld [vmem:[%s3] sm:$0xff]
    %v43 = vld [vmem:[%s3 + $0x8] sm:$0xff]
    %v44 = vld [vmem:[%s3 + $0x10] sm:$0xff]
    %v45 = vld [vmem:[%s3 + $0x18] sm:$0xff]
    %v46 = vld [vmem:[%s3 + $0x20] sm:$0xff]
    %v47 = vld [vmem:[%s3 + $0x28] sm:$0xff]
    %v48 = vld [vmem:[%s3 + $0x30] sm:$0xff]
    %v49 = vld [vmem:[%s3 + $0x38] sm:$0xff]
    %v50 = vld [vmem:[%s3 + $0x40] sm:$0xff]
    %v51 = vld [vmem:[%s3 + $0x48] sm:$0xff]
    %v52 = vld [vmem:[%s3 + $0x50] sm:$0xff]
    %v53 = vld [vmem:[%s3 + $0x58] sm:$0xff]
    %vm54 = vcmask 195584
    %v56 = vsel %vm54, %v33, 0
    %58 = vmatprep.subr.mxu0 %v43
    %59 = vmatpush1.msra.mxu0 %v42
    %60 = vmatprep.subr.mxu0 %v47
    %61 = vmatpush1.msra.mxu0 %v46
    %62 = vmatprep.subr.mxu0 %v51
    %63 = vmatpush1.msra.mxu0 %v50
    %64 = vmatprep.subr.mxu0 0.0
    %65 = vmatpush1.msra.mxu0 0.0
    %66 = vmatprep.subr.mxu0 0.0
    %67 = vmatpush1.msra.mxu0 0.0
    %68 = vmatprep.subr.mxu0 0.0
    %69 = vmatpush1.msra.mxu0 0.0
    %70 = vmatprep.subr.mxu0 0.0
    %71 = vmatpush1.msra.mxu0 0.0
    %72 = vmatprep.subr.mxu0 0.0
    %73 = vmatpush1.msra.mxu0 0.0
    %74 = vmatprep.subr.mxu0 0.0
    %75 = vmatpush1.msra.mxu0 0.0
    %76 = vmatprep.subr.mxu0 0.0
    %77 = vmatpush1.msra.mxu0 0.0
    %78 = vmatprep.subr.mxu0 0.0
    %79 = vmatpush1.msra.mxu0 0.0
    %80 = vmatprep.subr.mxu0 0.0
    %81 = vmatpush1.msra.mxu0 0.0
    %82 = vmatprep.subr.mxu0 0.0
    %83 = vmatpush1.msra.mxu0 0.0
    %84 = vmatprep.subr.mxu0 0.0
    %85 = vmatpush1.msra.mxu0 0.0
    %86 = vmatprep.subr.mxu0 0.0
    %87 = vmatpush1.msra.mxu0 0.0
    %88 = vmatprep.subr.mxu0 0.0
    %89 = vmatpush1.msra.mxu0 0.0
    %90 = vmatprep.subr.mxu0 0.0
    %91 = vmatpush1.msra.mxu0 0.0
    %92 = vmatprep.subr.mxu0 0.0
    %93 = vmatpush1.msra.mxu0 0.0
    %94 = vmatprep.subr.mxu0 0.0
    %95 = vmatpush1.msra.mxu0 0.0
    %96 = vmatprep.subr.mxu0 0.0
    %97 = vmatpush1.msra.mxu0 0.0
    %98 = vmatprep.subr.mxu0 0.0
    %99 = vmatpush1.msra.mxu0 0.0
    %100 = vmatprep.subr.mxu0 0.0
    %101 = vmatpush1.msra.mxu0 0.0
    %102 = vmatprep.subr.mxu0 0.0
    %103 = vmatpush1.msra.mxu0 0.0
    %104 = vmatprep.subr.mxu0 0.0
    %105 = vmatpush1.msra.mxu0 0.0
    %106 = vmatprep.subr.mxu0 0.0
    %107 = vmatpush1.msra.mxu0 0.0
    %108 = vmatprep.subr.mxu0 0.0
    %109 = vmatpush1.msra.mxu0 0.0
    %110 = vmatprep.subr.mxu0 0.0
    %111 = vmatpush1.msra.mxu0 0.0
    %112 = vmatprep.subr.mxu0 0.0
    %113 = vmatpush1.msra.mxu0 0.0
    %114 = vmatprep.subr.mxu0 0.0
    %115 = vmatpush1.msra.mxu0 0.0
    %116 = vmatprep.subr.mxu0 0.0
    %117 = vmatpush1.msra.mxu0 0.0
    %118 = vmatprep.subr.mxu0 0.0
    %119 = vmatpush1.msra.mxu0 0.0
    %120 = vmatprep.subr.mxu0 0.0
    %121 = vmatpush1.msra.mxu0 0.0
    %122 = vmatprep.mubr.f32.mxu0 0.0
    %123 = vmatmul.mubr.f32.gmra.mrb[0].mxu0 %v56
    %v124 = vpop.f32.mrb[0].mxu0
    %v125 = vadd.f32 %v34, %v124
    %v126 = vpop.f32.mrb[0].mxu0
    %v127 = vadd.f32 %v35, %v126
    %128 = vdwg.mxu0
    %129 = vmatprep.subr.mxu0 %v45
    %130 = vmatpush1.msra.mxu0 %v44
    %131 = vmatprep.subr.mxu0 %v49
    %132 = vmatpush1.msra.mxu0 %v48
    %133 = vmatprep.subr.mxu0 %v53
    %134 = vmatpush1.msra.mxu0 %v52
    %135 = vmatprep.subr.mxu0 0.0
    %136 = vmatpush1.msra.mxu0 0.0
    %137 = vmatprep.subr.mxu0 0.0
    %138 = vmatpush1.msra.mxu0 0.0
    %139 = vmatprep.subr.mxu0 0.0
    %140 = vmatpush1.msra.mxu0 0.0
    %141 = vmatprep.subr.mxu0 0.0
    %142 = vmatpush1.msra.mxu0 0.0
    %143 = vmatprep.subr.mxu0 0.0
    %144 = vmatpush1.msra.mxu0 0.0
    %145 = vmatprep.subr.mxu0 0.0
    %146 = vmatpush1.msra.mxu0 0.0
    %147 = vmatprep.subr.mxu0 0.0
    %148 = vmatpush1.msra.mxu0 0.0
    %149 = vmatprep.subr.mxu0 0.0
    %150 = vmatpush1.msra.mxu0 0.0
    %151 = vmatprep.subr.mxu0 0.0
    %152 = vmatpush1.msra.mxu0 0.0
    %153 = vmatprep.subr.mxu0 0.0
    %154 = vmatpush1.msra.mxu0 0.0
    %155 = vmatprep.subr.mxu0 0.0
    %156 = vmatpush1.msra.mxu0 0.0
    %157 = vmatprep.subr.mxu0 0.0
    %158 = vmatpush1.msra.mxu0 0.0
    %159 = vmatprep.subr.mxu0 0.0
    %160 = vmatpush1.msra.mxu0 0.0
    %161 = vmatprep.subr.mxu0 0.0
    %162 = vmatpush1.msra.mxu0 0.0
    %163 = vmatprep.subr.mxu0 0.0
    %164 = vmatpush1.msra.mxu0 0.0
    %165 = vmatprep.subr.mxu0 0.0
    %166 = vmatpush1.msra.mxu0 0.0
    %167 = vmatprep.subr.mxu0 0.0
    %168 = vmatpush1.msra.mxu0 0.0
    %169 = vmatprep.subr.mxu0 0.0
    %170 = vmatpush1.msra.mxu0 0.0
    %171 = vmatprep.subr.mxu0 0.0
    %172 = vmatpush1.msra.mxu0 0.0
    %173 = vmatprep.subr.mxu0 0.0
    %174 = vmatpush1.msra.mxu0 0.0
    %175 = vmatprep.subr.mxu0 0.0
    %176 = vmatpush1.msra.mxu0 0.0
    %177 = vmatprep.subr.mxu0 0.0
    %178 = vmatpush1.msra.mxu0 0.0
    %179 = vmatprep.subr.mxu0 0.0
    %180 = vmatpush1.msra.mxu0 0.0
    %181 = vmatprep.subr.mxu0 0.0
    %182 = vmatpush1.msra.mxu0 0.0
    %183 = vmatprep.subr.mxu0 0.0
    %184 = vmatpush1.msra.mxu0 0.0
    %185 = vmatprep.subr.mxu0 0.0
    %186 = vmatpush1.msra.mxu0 0.0
    %187 = vmatprep.subr.mxu0 0.0
    %188 = vmatpush1.msra.mxu0 0.0
    %189 = vmatprep.subr.mxu0 0.0
    %190 = vmatpush1.msra.mxu0 0.0
    %191 = vmatprep.subr.mxu0 0.0
    %192 = vmatpush1.msra.mxu0 0.0
    %193 = vmatprep.mubr.f32.mxu0 0.0
    %194 = vmatmul.mubr.f32.gmra.mrb[0].mxu0 %v56
    %v195 = vpop.f32.mrb[0].mxu0
    %v196 = vadd.f32 %v36, %v195
    %v197 = vpop.f32.mrb[0].mxu0
    %v198 = vadd.f32 %v37, %v197
    %199 = vdwg.mxu0
    %v200 = vmax.f32 %v125, 0.0
    %v201 = vmax.f32 %v127, 0.0
    %v202 = vmax.f32 %v196, 0.0
    %v203 = vmax.f32 %v198, 0.0
    %v204 = vld [vmem:[%s4] sm:$0xff]
    %v205 = vld [vmem:[%s4 + $0x8] sm:$0xff]
    %v206 = vld [vmem:[%s4 + $0x10] sm:$0xff]
    %v207 = vld [vmem:[%s4 + $0x18] sm:$0xff]
    %v208 = vld [vmem:[%s4 + $0x20] sm:$0xff]
    %v209 = vld [vmem:[%s4 + $0x28] sm:$0xff]
    %v210 = vld [vmem:[%s4 + $0x30] sm:$0xff]
    %v211 = vld [vmem:[%s4 + $0x38] sm:$0xff]
    %v212 = vld [vmem:[%s4 + $0x40] sm:$0xff]
    %v213 = vld [vmem:[%s4 + $0x48] sm:$0xff]
    %v214 = vld [vmem:[%s4 + $0x50] sm:$0xff]
    %v215 = vld [vmem:[%s4 + $0x58] sm:$0xff]
    %v216 = vld [vmem:[%s4 + $0x60] sm:$0xff]
    %v217 = vld [vmem:[%s4 + $0x68] sm:$0xff]
    %v218 = vld [vmem:[%s4 + $0x70] sm:$0xff]
    %v219 = vld [vmem:[%s4 + $0x78] sm:$0xff]
    %v220 = vld [vmem:[%s4 + $0x80] sm:$0xff]
    %v221 = vld [vmem:[%s4 + $0x88] sm:$0xff]
    %v222 = vld [vmem:[%s4 + $0x90] sm:$0xff]
    %v223 = vld [vmem:[%s4 + $0x98] sm:$0xff]
    %v224 = vld [vmem:[%s4 + $0xa0] sm:$0xff]
    %v225 = vld [vmem:[%s4 + $0xa8] sm:$0xff]
    %v226 = vld [vmem:[%s4 + $0xb0] sm:$0xff]
    %v227 = vld [vmem:[%s4 + $0xb8] sm:$0xff]
    %v228 = vld [vmem:[%s4 + $0xc0] sm:$0xff]
    %v229 = vld [vmem:[%s4 + $0xc8] sm:$0xff]
    %v230 = vld [vmem:[%s4 + $0xd0] sm:$0xff]
    %v231 = vld [vmem:[%s4 + $0xd8] sm:$0xff]
    %v232 = vld [vmem:[%s4 + $0xe0] sm:$0xff]
    %v233 = vld [vmem:[%s4 + $0xe8] sm:$0xff]
    %v234 = vld [vmem:[%s4 + $0xf0] sm:$0xff]
    %v235 = vld [vmem:[%s4 + $0xf8] sm:$0xff]
    %v236 = vld [vmem:[%s4 + $0x100] sm:$0xff]
    %v237 = vld [vmem:[%s4 + $0x108] sm:$0xff]
    %v238 = vld [vmem:[%s4 + $0x110] sm:$0xff]
    %v239 = vld [vmem:[%s4 + $0x118] sm:$0xff]
    %v240 = vld [vmem:[%s4 + $0x120] sm:$0xff]
    %v241 = vld [vmem:[%s4 + $0x128] sm:$0xff]
    %v242 = vld [vmem:[%s4 + $0x130] sm:$0xff]
    %v243 = vld [vmem:[%s4 + $0x138] sm:$0xff]
    %v244 = vld [vmem:[%s4 + $0x140] sm:$0xff]
    %v245 = vld [vmem:[%s4 + $0x148] sm:$0xff]
    %v246 = vld [vmem:[%s4 + $0x150] sm:$0xff]
    %v247 = vld [vmem:[%s4 + $0x158] sm:$0xff]
    %v248 = vld [vmem:[%s4 + $0x160] sm:$0xff]
    %v249 = vld [vmem:[%s4 + $0x168] sm:$0xff]
    %v250 = vld [vmem:[%s4 + $0x170] sm:$0xff]
    %v251 = vld [vmem:[%s4 + $0x178] sm:$0xff]
    %v252 = vld [vmem:[%s4 + $0x180] sm:$0xff]
    %v253 = vld [vmem:[%s4 + $0x188] sm:$0xff]
    %v254 = vld [vmem:[%s4 + $0x190] sm:$0xff]
    %v255 = vld [vmem:[%s4 + $0x198] sm:$0xff]
    %v256 = vld [vmem:[%s4 + $0x1a0] sm:$0xff]
    %v257 = vld [vmem:[%s4 + $0x1a8] sm:$0xff]
    %v258 = vld [vmem:[%s4 + $0x1b0] sm:$0xff]
    %v259 = vld [vmem:[%s4 + $0x1b8] sm:$0xff]
    %v260 = vld [vmem:[%s4 + $0x1c0] sm:$0xff]
    %v261 = vld [vmem:[%s4 + $0x1c8] sm:$0xff]
    %v262 = vld [vmem:[%s4 + $0x1d0] sm:$0xff]
    %v263 = vld [vmem:[%s4 + $0x1d8] sm:$0xff]
    %v264 = vld [vmem:[%s4 + $0x1e0] sm:$0xff]
    %v265 = vld [vmem:[%s4 + $0x1e8] sm:$0xff]
    %v266 = vld [vmem:[%s4 + $0x1f0] sm:$0xff]
    %v267 = vld [vmem:[%s4 + $0x1f8] sm:$0xff]
    %v268 = vld [vmem:[%s5] sm:$0x1]
    %v270 = vlaneseq
    %v271 = vshrl.u32 %v270, 7
    %v272 = vsub.s32 0, %v271
    %v273 = vrot.slane %v268, %v272
    %275 = vmatprep.subr.mxu0 0.0
    %276 = vmatpush1.msra.mxu0 %v204
    %277 = vmatprep.subr.mxu0 0.0
    %278 = vmatpush1.msra.mxu0 %v205
    %279 = vmatprep.subr.mxu0 0.0
    %280 = vmatpush1.msra.mxu0 %v206
    %281 = vmatprep.subr.mxu0 0.0
    %282 = vmatpush1.msra.mxu0 %v207
    %283 = vmatprep.subr.mxu0 0.0
    %284 = vmatpush1.msra.mxu0 %v208
    %285 = vmatprep.subr.mxu0 0.0
    %286 = vmatpush1.msra.mxu0 %v209
    %287 = vmatprep.subr.mxu0 0.0
    %288 = vmatpush1.msra.mxu0 %v210
    %289 = vmatprep.subr.mxu0 0.0
    %290 = vmatpush1.msra.mxu0 %v211
    %291 = vmatprep.subr.mxu0 0.0
    %292 = vmatpush1.msra.mxu0 %v212
    %293 = vmatprep.subr.mxu0 0.0
    %294 = vmatpush1.msra.mxu0 %v213
    %295 = vmatprep.subr.mxu0 0.0
    %296 = vmatpush1.msra.mxu0 %v214
    %297 = vmatprep.subr.mxu0 0.0
    %298 = vmatpush1.msra.mxu0 %v215
    %299 = vmatprep.subr.mxu0 0.0
    %300 = vmatpush1.msra.mxu0 %v216
    %301 = vmatprep.subr.mxu0 0.0
    %302 = vmatpush1.msra.mxu0 %v217
    %303 = vmatprep.subr.mxu0 0.0
    %304 = vmatpush1.msra.mxu0 %v218
    %305 = vmatprep.subr.mxu0 0.0
    %306 = vmatpush1.msra.mxu0 %v219
    %307 = vmatprep.subr.mxu0 0.0
    %308 = vmatpush1.msra.mxu0 %v220
    %309 = vmatprep.subr.mxu0 0.0
    %310 = vmatpush1.msra.mxu0 %v221
    %311 = vmatprep.subr.mxu0 0.0
    %312 = vmatpush1.msra.mxu0 %v222
    %313 = vmatprep.subr.mxu0 0.0
    %314 = vmatpush1.msra.mxu0 %v223
    %315 = vmatprep.subr.mxu0 0.0
    %316 = vmatpush1.msra.mxu0 %v224
    %317 = vmatprep.subr.mxu0 0.0
    %318 = vmatpush1.msra.mxu0 %v225
    %319 = vmatprep.subr.mxu0 0.0
    %320 = vmatpush1.msra.mxu0 %v226
    %321 = vmatprep.subr.mxu0 0.0
    %322 = vmatpush1.msra.mxu0 %v227
    %323 = vmatprep.subr.mxu0 0.0
    %324 = vmatpush1.msra.mxu0 %v228
    %325 = vmatprep.subr.mxu0 0.0
    %326 = vmatpush1.msra.mxu0 %v229
    %327 = vmatprep.subr.mxu0 0.0
    %328 = vmatpush1.msra.mxu0 %v230
    %329 = vmatprep.subr.mxu0 0.0
    %330 = vmatpush1.msra.mxu0 %v231
    %331 = vmatprep.subr.mxu0 0.0
    %332 = vmatpush1.msra.mxu0 %v232
    %333 = vmatprep.subr.mxu0 0.0
    %334 = vmatpush1.msra.mxu0 %v233
    %335 = vmatprep.subr.mxu0 0.0
    %336 = vmatpush1.msra.mxu0 %v234
    %337 = vmatprep.subr.mxu0 0.0
    %338 = vmatpush1.msra.mxu0 %v235
    %339 = vmatprep.mubr.f32.mxu0 %v201
    %340 = vmatmul.mubr.f32.gmra.mrb[0].mxu0 %v200
    %v341 = vpop.f32.mrb[0].mxu0
    %v342 = vadd.f32 %v273, %v341
    %v343 = vpop.f32.mrb[0].mxu0
    %344 = vdwg.mxu0
    %345 = vmatprep.subr.mxu0 0.0
    %346 = vmatpush1.msra.mxu0 %v236
    %347 = vmatprep.subr.mxu0 0.0
    %348 = vmatpush1.msra.mxu0 %v237
    %349 = vmatprep.subr.mxu0 0.0
    %350 = vmatpush1.msra.mxu0 %v238
    %351 = vmatprep.subr.mxu0 0.0
    %352 = vmatpush1.msra.mxu0 %v239
    %353 = vmatprep.subr.mxu0 0.0
    %354 = vmatpush1.msra.mxu0 %v240
    %355 = vmatprep.subr.mxu0 0.0
    %356 = vmatpush1.msra.mxu0 %v241
    %357 = vmatprep.subr.mxu0 0.0
    %358 = vmatpush1.msra.mxu0 %v242
    %359 = vmatprep.subr.mxu0 0.0
    %360 = vmatpush1.msra.mxu0 %v243
    %361 = vmatprep.subr.mxu0 0.0
    %362 = vmatpush1.msra.mxu0 %v244
    %363 = vmatprep.subr.mxu0 0.0
    %364 = vmatpush1.msra.mxu0 %v245
    %365 = vmatprep.subr.mxu0 0.0
    %366 = vmatpush1.msra.mxu0 %v246
    %367 = vmatprep.subr.mxu0 0.0
    %368 = vmatpush1.msra.mxu0 %v247
    %369 = vmatprep.subr.mxu0 0.0
    %370 = vmatpush1.msra.mxu0 %v248
    %371 = vmatprep.subr.mxu0 0.0
    %372 = vmatpush1.msra.mxu0 %v249
    %373 = vmatprep.subr.mxu0 0.0
    %374 = vmatpush1.msra.mxu0 %v250
    %375 = vmatprep.subr.mxu0 0.0
    %376 = vmatpush1.msra.mxu0 %v251
    %377 = vmatprep.subr.mxu0 0.0
    %378 = vmatpush1.msra.mxu0 %v252
    %379 = vmatprep.subr.mxu0 0.0
    %380 = vmatpush1.msra.mxu0 %v253
    %381 = vmatprep.subr.mxu0 0.0
    %382 = vmatpush1.msra.mxu0 %v254
    %383 = vmatprep.subr.mxu0 0.0
    %384 = vmatpush1.msra.mxu0 %v255
    %385 = vmatprep.subr.mxu0 0.0
    %386 = vmatpush1.msra.mxu0 %v256
    %387 = vmatprep.subr.mxu0 0.0
    %388 = vmatpush1.msra.mxu0 %v257
    %389 = vmatprep.subr.mxu0 0.0
    %390 = vmatpush1.msra.mxu0 %v258
    %391 = vmatprep.subr.mxu0 0.0
    %392 = vmatpush1.msra.mxu0 %v259
    %393 = vmatprep.subr.mxu0 0.0
    %394 = vmatpush1.msra.mxu0 %v260
    %395 = vmatprep.subr.mxu0 0.0
    %396 = vmatpush1.msra.mxu0 %v261
    %397 = vmatprep.subr.mxu0 0.0
    %398 = vmatpush1.msra.mxu0 %v262
    %399 = vmatprep.subr.mxu0 0.0
    %400 = vmatpush1.msra.mxu0 %v263
    %401 = vmatprep.subr.mxu0 0.0
    %402 = vmatpush1.msra.mxu0 %v264
    %403 = vmatprep.subr.mxu0 0.0
    %404 = vmatpush1.msra.mxu0 %v265
    %405 = vmatprep.subr.mxu0 0.0
    %406 = vmatpush1.msra.mxu0 %v266
    %407 = vmatprep.subr.mxu0 0.0
    %408 = vmatpush1.msra.mxu0 %v267
    %409 = vmatprep.mubr.f32.mxu0 %v203
    %410 = vmatmul.mubr.f32.gmra.mrb[0].mxu0 %v202
    %v411 = vpop.f32.mrb[0].mxu0
    %v412 = vadd.f32 %v342, %v411
    %v413 = vpop.f32.mrb[0].mxu0
    %414 = vdwg.mxu0
    %v415 = vld [vmem:[%s2] sm:$0xff]
    %v416 = vmul.f32 %v412, 0.5
    %v417 = vmul.f32 %v416, 1.442695
    %v418 = vpow.pop %v417
    %420 = vrot.lane.b32.xlu0 %v418, 120
    %v421 = vpop.permute.xlu0 %420
    %v423 = vmul.f32 %v415, %v421
    %v424 = vadd.f32 %v412, %v423
    %v425 = vld [vmem:[%s3 + $0x60] sm:$0xff]
    %v426 = vld [vmem:[%s3 + $0x68] sm:$0xff]
    %v427 = vld [vmem:[%s3 + $0x70] sm:$0xff]
    %v428 = vld [vmem:[%s3 + $0x78] sm:$0xff]
    %vm429 = vcmask 64512
    %v431 = vsel %vm429, %v424, 0
    %433 = vmatprep.subr.mxu0 %v426
    %434 = vmatpush1.msra.mxu0 %v425
    %435 = vmatprep.subr.mxu0 0.0
    %436 = vmatpush1.msra.mxu0 0.0
    %437 = vmatprep.subr.mxu0 0.0
    %438 = vmatpush1.msra.mxu0 0.0
    %439 = vmatprep.subr.mxu0 0.0
    %440 = vmatpush1.msra.mxu0 0.0
    %441 = vmatprep.subr.mxu0 0.0
    %442 = vmatpush1.msra.mxu0 0.0
    %443 = vmatprep.subr.mxu0 0.0
    %444 = vmatpush1.msra.mxu0 0.0
    %445 = vmatprep.subr.mxu0 0.0
    %446 = vmatpush1.msra.mxu0 0.0
    %447 = vmatprep.subr.mxu0 0.0
    %448 = vmatpush1.msra.mxu0 0.0
    %449 = vmatprep.subr.mxu0 0.0
    %450 = vmatpush1.msra.mxu0 0.0
    %451 = vmatprep.subr.mxu0 0.0
    %452 = vmatpush1.msra.mxu0 0.0
    %453 = vmatprep.subr.mxu0 0.0
    %454 = vmatpush1.msra.mxu0 0.0
    %455 = vmatprep.subr.mxu0 0.0
    %456 = vmatpush1.msra.mxu0 0.0
    %457 = vmatprep.subr.mxu0 0.0
    %458 = vmatpush1.msra.mxu0 0.0
    %459 = vmatprep.subr.mxu0 0.0
    %460 = vmatpush1.msra.mxu0 0.0
    %461 = vmatprep.subr.mxu0 0.0
    %462 = vmatpush1.msra.mxu0 0.0
    %463 = vmatprep.subr.mxu0 0.0
    %464 = vmatpush1.msra.mxu0 0.0
    %465 = vmatprep.subr.mxu0 0.0
    %466 = vmatpush1.msra.mxu0 0.0
    %467 = vmatprep.subr.mxu0 0.0
    %468 = vmatpush1.msra.mxu0 0.0
    %469 = vmatprep.subr.mxu0 0.0
    %470 = vmatpush1.msra.mxu0 0.0
    %471 = vmatprep.subr.mxu0 0.0
    %472 = vmatpush1.msra.mxu0 0.0
    %473 = vmatprep.subr.mxu0 0.0
    %474 = vmatpush1.msra.mxu0 0.0
    %475 = vmatprep.subr.mxu0 0.0
    %476 = vmatpush1.msra.mxu0 0.0
    %477 = vmatprep.subr.mxu0 0.0
    %478 = vmatpush1.msra.mxu0 0.0
    %479 = vmatprep.subr.mxu0 0.0
    %480 = vmatpush1.msra.mxu0 0.0
    %481 = vmatprep.subr.mxu0 0.0
    %482 = vmatpush1.msra.mxu0 0.0
    %483 = vmatprep.subr.mxu0 0.0
    %484 = vmatpush1.msra.mxu0 0.0
    %485 = vmatprep.subr.mxu0 0.0
    %486 = vmatpush1.msra.mxu0 0.0
    %487 = vmatprep.subr.mxu0 0.0
    %488 = vmatpush1.msra.mxu0 0.0
    %489 = vmatprep.subr.mxu0 0.0
    %490 = vmatpush1.msra.mxu0 0.0
    %491 = vmatprep.subr.mxu0 0.0
    %492 = vmatpush1.msra.mxu0 0.0
    %493 = vmatprep.subr.mxu0 0.0
    %494 = vmatpush1.msra.mxu0 0.0
    %495 = vmatprep.subr.mxu0 0.0
    %496 = vmatpush1.msra.mxu0 0.0
    %497 = vmatprep.mubr.f32.mxu0 0.0
    %498 = vmatmul.mubr.f32.gmra.mrb[0].mxu0 %v431
    %v499 = vpop.f32.mrb[0].mxu0
    %v500 = vadd.f32 %v38, %v499
    %v501 = vpop.f32.mrb[0].mxu0
    %v502 = vadd.f32 %v39, %v501
    %503 = vdwg.mxu0
    %504 = vmatprep.subr.mxu0 %v428
    %505 = vmatpush1.msra.mxu0 %v427
    %506 = vmatprep.subr.mxu0 0.0
    %507 = vmatpush1.msra.mxu0 0.0
    %508 = vmatprep.subr.mxu0 0.0
    %509 = vmatpush1.msra.mxu0 0.0
    %510 = vmatprep.subr.mxu0 0.0
    %511 = vmatpush1.msra.mxu0 0.0
    %512 = vmatprep.subr.mxu0 0.0
    %513 = vmatpush1.msra.mxu0 0.0
    %514 = vmatprep.subr.mxu0 0.0
    %515 = vmatpush1.msra.mxu0 0.0
    %516 = vmatprep.subr.mxu0 0.0
    %517 = vmatpush1.msra.mxu0 0.0
    %518 = vmatprep.subr.mxu0 0.0
    %519 = vmatpush1.msra.mxu0 0.0
    %520 = vmatprep.subr.mxu0 0.0
    %521 = vmatpush1.msra.mxu0 0.0
    %522 = vmatprep.subr.mxu0 0.0
    %523 = vmatpush1.msra.mxu0 0.0
    %524 = vmatprep.subr.mxu0 0.0
    %525 = vmatpush1.msra.mxu0 0.0
    %526 = vmatprep.subr.mxu0 0.0
    %527 = vmatpush1.msra.mxu0 0.0
    %528 = vmatprep.subr.mxu0 0.0
    %529 = vmatpush1.msra.mxu0 0.0
    %530 = vmatprep.subr.mxu0 0.0
    %531 = vmatpush1.msra.mxu0 0.0
    %532 = vmatprep.subr.mxu0 0.0
    %533 = vmatpush1.msra.mxu0 0.0
    %534 = vmatprep.subr.mxu0 0.0
    %535 = vmatpush1.msra.mxu0 0.0
    %536 = vmatprep.subr.mxu0 0.0
    %537 = vmatpush1.msra.mxu0 0.0
    %538 = vmatprep.subr.mxu0 0.0
    %539 = vmatpush1.msra.mxu0 0.0
    %540 = vmatprep.subr.mxu0 0.0
    %541 = vmatpush1.msra.mxu0 0.0
    %542 = vmatprep.subr.mxu0 0.0
    %543 = vmatpush1.msra.mxu0 0.0
    %544 = vmatprep.subr.mxu0 0.0
    %545 = vmatpush1.msra.mxu0 0.0
    %546 = vmatprep.subr.mxu0 0.0
    %547 = vmatpush1.msra.mxu0 0.0
    %548 = vmatprep.subr.mxu0 0.0
    %549 = vmatpush1.msra.mxu0 0.0
    %550 = vmatprep.subr.mxu0 0.0
    %551 = vmatpush1.msra.mxu0 0.0
    %552 = vmatprep.subr.mxu0 0.0
    %553 = vmatpush1.msra.mxu0 0.0
    %554 = vmatprep.subr.mxu0 0.0
    %555 = vmatpush1.msra.mxu0 0.0
    %556 = vmatprep.subr.mxu0 0.0
    %557 = vmatpush1.msra.mxu0 0.0
    %558 = vmatprep.subr.mxu0 0.0
    %559 = vmatpush1.msra.mxu0 0.0
    %560 = vmatprep.subr.mxu0 0.0
    %561 = vmatpush1.msra.mxu0 0.0
    %562 = vmatprep.subr.mxu0 0.0
    %563 = vmatpush1.msra.mxu0 0.0
    %564 = vmatprep.subr.mxu0 0.0
    %565 = vmatpush1.msra.mxu0 0.0
    %566 = vmatprep.subr.mxu0 0.0
    %567 = vmatpush1.msra.mxu0 0.0
    %568 = vmatprep.mubr.f32.mxu0 0.0
    %569 = vmatmul.mubr.f32.gmra.mrb[0].mxu0 %v431
    %v570 = vpop.f32.mrb[0].mxu0
    %v571 = vadd.f32 %v40, %v570
    %v572 = vpop.f32.mrb[0].mxu0
    %v573 = vadd.f32 %v41, %v572
    %574 = vdwg.mxu0
    %v575 = vmax.f32 %v500, 0.0
    %v576 = vmax.f32 %v502, 0.0
    %v577 = vmax.f32 %v571, 0.0
    %v578 = vmax.f32 %v573, 0.0
    %v579 = vld [vmem:[%s6] sm:$0xff]
    %v580 = vld [vmem:[%s6 + $0x8] sm:$0xff]
    %v581 = vld [vmem:[%s6 + $0x10] sm:$0xff]
    %v582 = vld [vmem:[%s6 + $0x18] sm:$0xff]
    %v583 = vld [vmem:[%s6 + $0x20] sm:$0xff]
    %v584 = vld [vmem:[%s6 + $0x28] sm:$0xff]
    %v585 = vld [vmem:[%s6 + $0x30] sm:$0xff]
    %v586 = vld [vmem:[%s6 + $0x38] sm:$0xff]
    %v587 = vld [vmem:[%s6 + $0x40] sm:$0xff]
    %v588 = vld [vmem:[%s6 + $0x48] sm:$0xff]
    %v589 = vld [vmem:[%s6 + $0x50] sm:$0xff]
    %v590 = vld [vmem:[%s6 + $0x58] sm:$0xff]
    %v591 = vld [vmem:[%s6 + $0x60] sm:$0xff]
    %v592 = vld [vmem:[%s6 + $0x68] sm:$0xff]
    %v593 = vld [vmem:[%s6 + $0x70] sm:$0xff]
    %v594 = vld [vmem:[%s6 + $0x78] sm:$0xff]
    %v595 = vld [vmem:[%s6 + $0x80] sm:$0xff]
    %v596 = vld [vmem:[%s6 + $0x88] sm:$0xff]
    %v597 = vld [vmem:[%s6 + $0x90] sm:$0xff]
    %v598 = vld [vmem:[%s6 + $0x98] sm:$0xff]
    %v599 = vld [vmem:[%s6 + $0xa0] sm:$0xff]
    %v600 = vld [vmem:[%s6 + $0xa8] sm:$0xff]
    %v601 = vld [vmem:[%s6 + $0xb0] sm:$0xff]
    %v602 = vld [vmem:[%s6 + $0xb8] sm:$0xff]
    %v603 = vld [vmem:[%s6 + $0xc0] sm:$0xff]
    %v604 = vld [vmem:[%s6 + $0xc8] sm:$0xff]
    %v605 = vld [vmem:[%s6 + $0xd0] sm:$0xff]
    %v606 = vld [vmem:[%s6 + $0xd8] sm:$0xff]
    %v607 = vld [vmem:[%s6 + $0xe0] sm:$0xff]
    %v608 = vld [vmem:[%s6 + $0xe8] sm:$0xff]
    %v609 = vld [vmem:[%s6 + $0xf0] sm:$0xff]
    %v610 = vld [vmem:[%s6 + $0xf8] sm:$0xff]
    %v611 = vld [vmem:[%s6 + $0x100] sm:$0xff]
    %v612 = vld [vmem:[%s6 + $0x108] sm:$0xff]
    %v613 = vld [vmem:[%s6 + $0x110] sm:$0xff]
    %v614 = vld [vmem:[%s6 + $0x118] sm:$0xff]
    %v615 = vld [vmem:[%s6 + $0x120] sm:$0xff]
    %v616 = vld [vmem:[%s6 + $0x128] sm:$0xff]
    %v617 = vld [vmem:[%s6 + $0x130] sm:$0xff]
    %v618 = vld [vmem:[%s6 + $0x138] sm:$0xff]
    %v619 = vld [vmem:[%s6 + $0x140] sm:$0xff]
    %v620 = vld [vmem:[%s6 + $0x148] sm:$0xff]
    %v621 = vld [vmem:[%s6 + $0x150] sm:$0xff]
    %v622 = vld [vmem:[%s6 + $0x158] sm:$0xff]
    %v623 = vld [vmem:[%s6 + $0x160] sm:$0xff]
    %v624 = vld [vmem:[%s6 + $0x168] sm:$0xff]
    %v625 = vld [vmem:[%s6 + $0x170] sm:$0xff]
    %v626 = vld [vmem:[%s6 + $0x178] sm:$0xff]
    %v627 = vld [vmem:[%s6 + $0x180] sm:$0xff]
    %v628 = vld [vmem:[%s6 + $0x188] sm:$0xff]
    %v629 = vld [vmem:[%s6 + $0x190] sm:$0xff]
    %v630 = vld [vmem:[%s6 + $0x198] sm:$0xff]
    %v631 = vld [vmem:[%s6 + $0x1a0] sm:$0xff]
    %v632 = vld [vmem:[%s6 + $0x1a8] sm:$0xff]
    %v633 = vld [vmem:[%s6 + $0x1b0] sm:$0xff]
    %v634 = vld [vmem:[%s6 + $0x1b8] sm:$0xff]
    %v635 = vld [vmem:[%s6 + $0x1c0] sm:$0xff]
    %v636 = vld [vmem:[%s6 + $0x1c8] sm:$0xff]
    %v637 = vld [vmem:[%s6 + $0x1d0] sm:$0xff]
    %v638 = vld [vmem:[%s6 + $0x1d8] sm:$0xff]
    %v639 = vld [vmem:[%s6 + $0x1e0] sm:$0xff]
    %v640 = vld [vmem:[%s6 + $0x1e8] sm:$0xff]
    %v641 = vld [vmem:[%s6 + $0x1f0] sm:$0xff]
    %v642 = vld [vmem:[%s6 + $0x1f8] sm:$0xff]
    %v643 = vld [vmem:[%s7] sm:$0x1]
    %v645 = vlaneseq
    %v646 = vshrl.u32 %v645, 7
    %v647 = vsub.s32 0, %v646
    %v648 = vrot.slane %v643, %v647
    %650 = vmatprep.subr.mxu0 0.0
    %651 = vmatpush1.msra.mxu0 %v579
    %652 = vmatprep.subr.mxu0 0.0
    %653 = vmatpush1.msra.mxu0 %v580
    %654 = vmatprep.subr.mxu0 0.0
    %655 = vmatpush1.msra.mxu0 %v581
    %656 = vmatprep.subr.mxu0 0.0
    %657 = vmatpush1.msra.mxu0 %v582
    %658 = vmatprep.subr.mxu0 0.0
    %659 = vmatpush1.msra.mxu0 %v583
    %660 = vmatprep.subr.mxu0 0.0
    %661 = vmatpush1.msra.mxu0 %v584
    %662 = vmatprep.subr.mxu0 0.0
    %663 = vmatpush1.msra.mxu0 %v585
    %664 = vmatprep.subr.mxu0 0.0
    %665 = vmatpush1.msra.mxu0 %v586
    %666 = vmatprep.subr.mxu0 0.0
    %667 = vmatpush1.msra.mxu0 %v587
    %668 = vmatprep.subr.mxu0 0.0
    %669 = vmatpush1.msra.mxu0 %v588
    %670 = vmatprep.subr.mxu0 0.0
    %671 = vmatpush1.msra.mxu0 %v589
    %672 = vmatprep.subr.mxu0 0.0
    %673 = vmatpush1.msra.mxu0 %v590
    %674 = vmatprep.subr.mxu0 0.0
    %675 = vmatpush1.msra.mxu0 %v591
    %676 = vmatprep.subr.mxu0 0.0
    %677 = vmatpush1.msra.mxu0 %v592
    %678 = vmatprep.subr.mxu0 0.0
    %679 = vmatpush1.msra.mxu0 %v593
    %680 = vmatprep.subr.mxu0 0.0
    %681 = vmatpush1.msra.mxu0 %v594
    %682 = vmatprep.subr.mxu0 0.0
    %683 = vmatpush1.msra.mxu0 %v595
    %684 = vmatprep.subr.mxu0 0.0
    %685 = vmatpush1.msra.mxu0 %v596
    %686 = vmatprep.subr.mxu0 0.0
    %687 = vmatpush1.msra.mxu0 %v597
    %688 = vmatprep.subr.mxu0 0.0
    %689 = vmatpush1.msra.mxu0 %v598
    %690 = vmatprep.subr.mxu0 0.0
    %691 = vmatpush1.msra.mxu0 %v599
    %692 = vmatprep.subr.mxu0 0.0
    %693 = vmatpush1.msra.mxu0 %v600
    %694 = vmatprep.subr.mxu0 0.0
    %695 = vmatpush1.msra.mxu0 %v601
    %696 = vmatprep.subr.mxu0 0.0
    %697 = vmatpush1.msra.mxu0 %v602
    %698 = vmatprep.subr.mxu0 0.0
    %699 = vmatpush1.msra.mxu0 %v603
    %700 = vmatprep.subr.mxu0 0.0
    %701 = vmatpush1.msra.mxu0 %v604
    %702 = vmatprep.subr.mxu0 0.0
    %703 = vmatpush1.msra.mxu0 %v605
    %704 = vmatprep.subr.mxu0 0.0
    %705 = vmatpush1.msra.mxu0 %v606
    %706 = vmatprep.subr.mxu0 0.0
    %707 = vmatpush1.msra.mxu0 %v607
    %708 = vmatprep.subr.mxu0 0.0
    %709 = vmatpush1.msra.mxu0 %v608
    %710 = vmatprep.subr.mxu0 0.0
    %711 = vmatpush1.msra.mxu0 %v609
    %712 = vmatprep.subr.mxu0 0.0
    %713 = vmatpush1.msra.mxu0 %v610
    %714 = vmatprep.mubr.f32.mxu0 %v576
    %715 = vmatmul.mubr.f32.gmra.mrb[0].mxu0 %v575
    %v716 = vpop.f32.mrb[0].mxu0
    %v717 = vadd.f32 %v648, %v716
    %v718 = vpop.f32.mrb[0].mxu0
    %719 = vdwg.mxu0
    %720 = vmatprep.subr.mxu0 0.0
    %721 = vmatpush1.msra.mxu0 %v611
    %722 = vmatprep.subr.mxu0 0.0
    %723 = vmatpush1.msra.mxu0 %v612
    %724 = vmatprep.subr.mxu0 0.0
    %725 = vmatpush1.msra.mxu0 %v613
    %726 = vmatprep.subr.mxu0 0.0
    %727 = vmatpush1.msra.mxu0 %v614
    %728 = vmatprep.subr.mxu0 0.0
    %729 = vmatpush1.msra.mxu0 %v615
    %730 = vmatprep.subr.mxu0 0.0
    %731 = vmatpush1.msra.mxu0 %v616
    %732 = vmatprep.subr.mxu0 0.0
    %733 = vmatpush1.msra.mxu0 %v617
    %734 = vmatprep.subr.mxu0 0.0
    %735 = vmatpush1.msra.mxu0 %v618
    %736 = vmatprep.subr.mxu0 0.0
    %737 = vmatpush1.msra.mxu0 %v619
    %738 = vmatprep.subr.mxu0 0.0
    %739 = vmatpush1.msra.mxu0 %v620
    %740 = vmatprep.subr.mxu0 0.0
    %741 = vmatpush1.msra.mxu0 %v621
    %742 = vmatprep.subr.mxu0 0.0
    %743 = vmatpush1.msra.mxu0 %v622
    %744 = vmatprep.subr.mxu0 0.0
    %745 = vmatpush1.msra.mxu0 %v623
    %746 = vmatprep.subr.mxu0 0.0
    %747 = vmatpush1.msra.mxu0 %v624
    %748 = vmatprep.subr.mxu0 0.0
    %749 = vmatpush1.msra.mxu0 %v625
    %750 = vmatprep.subr.mxu0 0.0
    %751 = vmatpush1.msra.mxu0 %v626
    %752 = vmatprep.subr.mxu0 0.0
    %753 = vmatpush1.msra.mxu0 %v627
    %754 = vmatprep.subr.mxu0 0.0
    %755 = vmatpush1.msra.mxu0 %v628
    %756 = vmatprep.subr.mxu0 0.0
    %757 = vmatpush1.msra.mxu0 %v629
    %758 = vmatprep.subr.mxu0 0.0
    %759 = vmatpush1.msra.mxu0 %v630
    %760 = vmatprep.subr.mxu0 0.0
    %761 = vmatpush1.msra.mxu0 %v631
    %762 = vmatprep.subr.mxu0 0.0
    %763 = vmatpush1.msra.mxu0 %v632
    %764 = vmatprep.subr.mxu0 0.0
    %765 = vmatpush1.msra.mxu0 %v633
    %766 = vmatprep.subr.mxu0 0.0
    %767 = vmatpush1.msra.mxu0 %v634
    %768 = vmatprep.subr.mxu0 0.0
    %769 = vmatpush1.msra.mxu0 %v635
    %770 = vmatprep.subr.mxu0 0.0
    %771 = vmatpush1.msra.mxu0 %v636
    %772 = vmatprep.subr.mxu0 0.0
    %773 = vmatpush1.msra.mxu0 %v637
    %774 = vmatprep.subr.mxu0 0.0
    %775 = vmatpush1.msra.mxu0 %v638
    %776 = vmatprep.subr.mxu0 0.0
    %777 = vmatpush1.msra.mxu0 %v639
    %778 = vmatprep.subr.mxu0 0.0
    %779 = vmatpush1.msra.mxu0 %v640
    %780 = vmatprep.subr.mxu0 0.0
    %781 = vmatpush1.msra.mxu0 %v641
    %782 = vmatprep.subr.mxu0 0.0
    %783 = vmatpush1.msra.mxu0 %v642
    %784 = vmatprep.mubr.f32.mxu0 %v578
    %785 = vmatmul.mubr.f32.gmra.mrb[0].mxu0 %v577
    %v786 = vpop.f32.mrb[0].mxu0
    %v787 = vadd.f32 %v717, %v786
    %v788 = vpop.f32.mrb[0].mxu0
    %789 = vdwg.mxu0
    %v790 = vmul.f32 %v787, 0.5
    %v791 = vtanh.pop %v790
    %v792 = vadd.f32 %v791, 1.0
    %v793 = vmul.f32 %v792, 0.5
    %vm794 = vcmask 130048
    %795 = vst.msk [vmem:[#allocation2] sm:$0xff] %vm794, %v412
    %796 = vst.msk [vmem:[#allocation4] sm:$0xff] %vm54, %v793
    // Predicated region
    $region34: #{tpu_custom_call.1} parent=1 // pred_check
      _
    $region35: #{tpu_custom_call.1} parent=1 // pred_check_branch
      %798 = sbr.rel (0) target = $region37
    $region36: #{tpu_custom_call.1} parent=1 // pred_region
      %s800 = ssub.s32 128, 128
      %801 = vsyncadd [#allocation3], %s800
      %s803 = sshll.u32 [#allocation2], 4
      %s804 = int_to_ptr.vmem [resolvable:$true] %s803
      %806 = dma.vmem_to_hbm [thread:$0]  %s804, 128, %s8, [#allocation3]
    $region37: #{tpu_custom_call.1} parent=1 // pred_fallthru
      _
    // Predicated region
    $region38: #{tpu_custom_call.1} parent=1 // pred_check
      _
    $region39: #{tpu_custom_call.1} parent=1 // pred_check_branch
      %808 = sbr.rel (0) target = $region41
    $region40: #{tpu_custom_call.1} parent=1 // pred_region
      %s810 = ssub.s32 128, 128
      %811 = vsyncadd [#allocation5], %s810
      %s813 = sshll.u32 [#allocation4], 4
      %s814 = int_to_ptr.vmem [resolvable:$true] %s813
      %816 = dma.vmem_to_hbm [thread:$0]  %s814, 128, %s9, [#allocation5]
    $region41: #{tpu_custom_call.1} parent=1 // pred_fallthru
      _
    // Predicated region
    $region42: #{tpu_custom_call.1} parent=1 // pred_check
      _
    $region43: #{tpu_custom_call.1} parent=1 // pred_check_branch
      %818 = sbr.rel (0) target = $region45
    $region44: #{tpu_custom_call.1} parent=1 // pred_region
      %819 = dma.done [#allocation3], 128
    $region45: #{tpu_custom_call.1} parent=1 // pred_fallthru
      _
    // Predicated region
    $region46: #{tpu_custom_call.1} parent=1 // pred_check
      _
    $region47: #{tpu_custom_call.1} parent=1 // pred_check_branch
      %821 = sbr.rel (0) target = $region49
    $region48: #{tpu_custom_call.1} parent=1 // pred_region
      %822 = dma.done [#allocation5], 128
    $region49: #{tpu_custom_call.1} parent=1 // pred_fallthru
      _
    %823 = vsyncpa [#allocation3], 1
    %824 = vsyncpa [#allocation5], 1

</llo_original>
